<compile_context>
chip_gen: v7x
topology: tpu7x:2x2x1
jax: 0.10.0
libtpu: 0.0.40
codegen_flags: <defaults>
</compile_context>

<pallas_src>
import functools

import jax
import jax.numpy as jnp
import numpy as np
from jax.experimental import pallas as pl
from jax.experimental.pallas import tpu as pltpu  # noqa: F401  (TPU backend)

# ---- static configuration (mirrors the config dict of TorchModel) ----------
POOLING = "max"      # config['pooling_style']  ('max' or 'mean')
HIDDEN = 32          # config['hidden_size']
CLASS_NUM = 5        # config['class_num']
VOCAB = 30           # config['vocab_size']
SEQ_LEN = 8          # sequence length (even, so MaxPool1d(2) is exact)
BATCH = 2
C_PAD = 128          # lane-dense padded class dim for the output slab


def _fused_forward_kernel(tok_ref, emb_ref, w_ref, cb_ref, cw_ref, clb_ref, o_ref,
                          *, seq_len):
    """Whole-batch fused forward: embed + conv(k=3,pad=1) + ReLU + pool + linear.

    tok_ref : (B*L, 1)   int32 token ids (batch items stacked along rows)
    emb_ref : (V_pad, H) embedding table (row 0 is the zero padding row)
    w_ref   : (3H, H)    fused conv weight, rows = [tap t-1 ; tap t ; tap t+1]
    cb_ref  : (1, H)     conv bias
    cw_ref  : (H, C_PAD) classify weight (transposed, zero-padded to 128 lanes)
    clb_ref : (1, C_PAD) classify bias (zero-padded)
    o_ref   : (B, C_PAD) logits slab
    """
    BL = tok_ref.shape[0]
    V, H = emb_ref.shape

    # --- Embedding lookup fused as one-hot @ table (exact, MXU-friendly) ---
    tok = tok_ref[...]                                               # (BL, 1) int32
    vocab_iota = jax.lax.broadcasted_iota(jnp.int32, (BL, V), 1)
    onehot = (tok == vocab_iota).astype(jnp.float32)                 # (BL, V)
    x = jnp.dot(onehot, emb_ref[...], preferred_element_type=jnp.float32)  # (BL, H)

    # --- Shifted copies for Conv1d(k=3, pad=1); zero at per-item seq boundaries ---
    zero_row = jnp.zeros((1, H), jnp.float32)
    x_prev = jnp.concatenate([zero_row, x[: BL - 1, :]], axis=0)     # x[t-1]
    x_next = jnp.concatenate([x[1:, :], zero_row], axis=0)           # x[t+1]
    pos = jax.lax.broadcasted_iota(jnp.int32, (BL, H), 0) % seq_len  # position within item
    x_prev = jnp.where(pos > 0, x_prev, 0.0)
    x_next = jnp.where(pos < seq_len - 1, x_next, 0.0)

    # --- Single fused conv matmul: (BL, 3H) @ (3H, H), + bias, ReLU ---
    xc = jnp.concatenate([x_prev, x, x_next], axis=-1)               # (BL, 3H)
    conv = jnp.dot(xc, w_ref[...], preferred_element_type=jnp.float32) + cb_ref[...]
    conv = jnp.maximum(conv, 0.0)

    # --- MaxPool1d(2) + max over pooled seq == max over all L rows (for 'max') ---
    rows = []
    for b in range(BL // seq_len):
        seg = conv[b * seq_len:(b + 1) * seq_len, :]                 # (L, H), 8-row aligned
        if POOLING == "max":
            rows.append(jnp.max(seg, axis=0, keepdims=True))
        else:  # 'mean': mean over the L//2 pairwise maxes
            acc = None
            for i in range(seq_len // 2):
                pair = jnp.max(seg[2 * i:2 * i + 2, :], axis=0, keepdims=True)
                acc = pair if acc is None else acc + pair
            rows.append(acc / float(seq_len // 2))
    pooled = rows[0] if len(rows) == 1 else jnp.concatenate(rows, axis=0)   # (B, H)

    # --- classify: Linear(H, C) into a lane-dense 128-wide output slab ---
    logits = jnp.dot(pooled, cw_ref[...], preferred_element_type=jnp.float32) + clb_ref[...]
    o_ref[...] = logits.astype(o_ref.dtype)


def prepare_params(emb_table, conv_w, conv_b, cls_w, cls_b):
    """One-time repacking of the PyTorch-layout parameters (off the hot path)."""
    V, H = emb_table.shape
    C = cls_w.shape[0]
    v_pad = ((V + 7) // 8) * 8
    emb_pad = jnp.zeros((v_pad, H), jnp.float32).at[:V, :].set(emb_table.astype(jnp.float32))
    # conv weight (H_out, H_in, 3) -> (3, H_in, H_out) -> (3H, H); row index = k*H + i.
    w_fused = jnp.transpose(conv_w, (2, 1, 0)).reshape(3 * H, H).astype(jnp.float32)
    cb = conv_b.reshape(1, H).astype(jnp.float32)
    cw_pad = jnp.zeros((H, C_PAD), jnp.float32).at[:, :C].set(cls_w.T.astype(jnp.float32))
    clb_pad = jnp.zeros((1, C_PAD), jnp.float32).at[0, :C].set(cls_b.astype(jnp.float32))
    return emb_pad, w_fused, cb, cw_pad, clb_pad


@jax.jit
def torch_model_forward(tokens, emb_pad, w_fused, cb, cw_pad, clb_pad):
    """tokens: (B, L) int32.  Returns logits (B, CLASS_NUM) float32."""
    B, L = tokens.shape
    tok2d = tokens.reshape(B * L, 1).astype(jnp.int32)
    kernel = functools.partial(_fused_forward_kernel, seq_len=L)
    out = pl.pallas_call(
        kernel,
        out_shape=jax.ShapeDtypeStruct((B, C_PAD), jnp.float32),
    )(tok2d, emb_pad, w_fused, cb, cw_pad, clb_pad)
    return out[:, :CLASS_NUM]


def _reference_forward(tokens, emb_table, conv_w, conv_b, cls_w, cls_b):
    """Pure-JAX reference reproducing the PyTorch forward."""
    x = emb_table[tokens]                                            # (B, L, H)
    xt = jnp.transpose(x, (0, 2, 1))                                 # (B, H, L)  NCW
    conv = jax.lax.conv_general_dilated(
        xt, conv_w, window_strides=(1,), padding=((1, 1),),
        dimension_numbers=("NCH", "OIH", "NCH"),
    ) + conv_b[None, :, None]
    conv = jnp.maximum(conv, 0.0)
    B, H, L = conv.shape
    mp = jnp.max(conv.reshape(B, H, L // 2, 2), axis=-1)             # MaxPool1d(2)
    x = jnp.transpose(mp, (0, 2, 1))                                 # (B, L//2, H)
    pooled = jnp.max(x, axis=1) if POOLING == "max" else jnp.mean(x, axis=1)
    return pooled @ cls_w.T + cls_b


if __name__ == "__main__":
    key = jax.random.PRNGKey(0)
    k1, k2, k3, k4, k5, k6 = jax.random.split(key, 6)

    emb_table = 0.02 * jax.random.normal(k1, (VOCAB, HIDDEN), jnp.float32)
    emb_table = emb_table.at[0].set(0.0)                 # padding_idx=0
    conv_w = 0.1 * jax.random.normal(k2, (HIDDEN, HIDDEN, 3), jnp.float32)
    conv_b = 0.1 * jax.random.normal(k3, (HIDDEN,), jnp.float32)
    cls_w = 0.1 * jax.random.normal(k4, (CLASS_NUM, HIDDEN), jnp.float32)
    cls_b = 0.1 * jax.random.normal(k5, (CLASS_NUM,), jnp.float32)

    tokens = jax.random.randint(k6, (BATCH, SEQ_LEN), 0, VOCAB, dtype=jnp.int32)

    # One-time parameter repacking (not on the per-call hot path).
    emb_pad, w_fused, cb, cw_pad, clb_pad = prepare_params(
        emb_table, conv_w, conv_b, cls_w, cls_b)

    logits = torch_model_forward(tokens, emb_pad, w_fused, cb, cw_pad, clb_pad)
    logits = jax.block_until_ready(logits)

    ref = _reference_forward(tokens, emb_table, conv_w, conv_b, cls_w, cls_b)
    np.testing.assert_allclose(np.asarray(logits), np.asarray(ref), rtol=1e-4, atol=1e-4)

    # TODO(synk): CrossEntropyLoss training path (target is not None) and the
    # bert/lstm encoder branches are not ported; only the cnn inference forward
    # (predict) is implemented in the kernel.
    print("KERNEL_OK")
</pallas_src>

<mosaic_0001>
module attributes {stable_mosaic.version = 11 : i64} {
  func.func @_fused_forward_kernel(%arg0: memref<16x1xi32, #tpu.memory_space<vmem>>, %arg1: memref<32x32xf32, #tpu.memory_space<vmem>>, %arg2: memref<96x32xf32, #tpu.memory_space<vmem>>, %arg3: memref<1x32xf32, #tpu.memory_space<vmem>>, %arg4: memref<32x128xf32, #tpu.memory_space<vmem>>, %arg5: memref<1x128xf32, #tpu.memory_space<vmem>>, %arg6: memref<2x128xf32, #tpu.memory_space<vmem>>) attributes {dimension_semantics = [], scalar_prefetch = 0 : i64, scratch_operands = 0 : i64, tpu.core_type = #tpu.core_type<tc>} {
    %c0 = arith.constant 0 : index
    %c0_0 = arith.constant 0 : index
    %0 = vector.load %arg0[%c0, %c0_0] : memref<16x1xi32, #tpu.memory_space<vmem>>, vector<16x1xi32>
    %1 = tpu.iota {dimensions = array<i32: 1>} : vector<16x32xi32>
    %2 = vector.broadcast %0 : vector<16x1xi32> to vector<16x32xi32>
    %3 = arith.cmpi eq, %2, %1 : vector<16x32xi32>
    %4 = arith.extui %3 : vector<16x32xi1> to vector<16x32xi32>
    %5 = arith.sitofp %4 : vector<16x32xi32> to vector<16x32xf32>
    %c0_1 = arith.constant 0 : index
    %c0_2 = arith.constant 0 : index
    %6 = vector.load %arg1[%c0_1, %c0_2] : memref<32x32xf32, #tpu.memory_space<vmem>>, vector<32x32xf32>
    %cst = arith.constant dense<0.000000e+00> : vector<16x32xf32>
    %7 = tpu.matmul %5, %6, %cst {dimension_numbers = #tpu.dot_dimension_numbers<[1], [0], [0], [1], [0, 0, 1, 1], [], []>} : vector<16x32xf32>, vector<32x32xf32>, vector<16x32xf32> -> vector<16x32xf32>
    %cst_3 = arith.constant 0.000000e+00 : f32
    %8 = vector.broadcast %cst_3 : f32 to vector<1x32xf32>
    %9 = vector.extract_strided_slice %7 {offsets = [0, 0], sizes = [15, 32], strides = [1, 1]} : vector<16x32xf32> to vector<15x32xf32>
    %10 = tpu.concatenate %8, %9 in 0 : vector<1x32xf32>, vector<15x32xf32> -> vector<16x32xf32>
    %11 = vector.extract_strided_slice %7 {offsets = [1, 0], sizes = [15, 32], strides = [1, 1]} : vector<16x32xf32> to vector<15x32xf32>
    %12 = tpu.concatenate %11, %8 in 0 : vector<15x32xf32>, vector<1x32xf32> -> vector<16x32xf32>
    %13 = tpu.iota {dimensions = array<i32: 0>} : vector<16x32xi32>
    %c8_i32 = arith.constant 8 : i32
    %c0_i32 = arith.constant 0 : i32
    %14 = arith.cmpi eq, %c8_i32, %c0_i32 : i32
    %c1_i32 = arith.constant 1 : i32
    %15 = arith.select %14, %c1_i32, %c8_i32 : i32
    %16 = vector.broadcast %15 : i32 to vector<16x32xi32>
    %17 = arith.remsi %13, %16 : vector<16x32xi32>
    %c0_i32_4 = arith.constant 0 : i32
    %18 = vector.broadcast %c0_i32_4 : i32 to vector<16x32xi32>
    %19 = arith.cmpi ne, %17, %18 : vector<16x32xi32>
    %c0_i32_5 = arith.constant 0 : i32
    %20 = vector.broadcast %c0_i32_5 : i32 to vector<16x32xi32>
    %21 = arith.cmpi slt, %17, %20 : vector<16x32xi32>
    %c0_i32_6 = arith.constant 0 : i32
    %22 = arith.cmpi slt, %15, %c0_i32_6 : i32
    %23 = vector.broadcast %22 : i1 to vector<16x32xi1>
    %24 = vector.broadcast %23 : vector<16x32xi1> to vector<16x32xi1>
    %25 = arith.xori %21, %24 : vector<16x32xi1>
    %26 = arith.andi %25, %19 : vector<16x32xi1>
    %27 = vector.broadcast %15 : i32 to vector<16x32xi32>
    %28 = arith.addi %17, %27 : vector<16x32xi32>
    %29 = arith.select %26, %28, %17 : vector<16x32xi1>, vector<16x32xi32>
    %c0_i32_7 = arith.constant 0 : i32
    %30 = vector.broadcast %c0_i32_7 : i32 to vector<16x32xi32>
    %31 = arith.cmpi sgt, %29, %30 : vector<16x32xi32>
    %cst_8 = arith.constant 0.000000e+00 : f32
    %32 = vector.broadcast %cst_8 : f32 to vector<16x32xf32>
    %33 = arith.select %31, %10, %32 : vector<16x32xi1>, vector<16x32xf32>
    %c7_i32 = arith.constant 7 : i32
    %34 = vector.broadcast %c7_i32 : i32 to vector<16x32xi32>
    %35 = arith.cmpi slt, %29, %34 : vector<16x32xi32>
    %cst_9 = arith.constant 0.000000e+00 : f32
    %36 = vector.broadcast %cst_9 : f32 to vector<16x32xf32>
    %37 = arith.select %35, %12, %36 : vector<16x32xi1>, vector<16x32xf32>
    %38 = tpu.concatenate %33, %7, %37 in 1 : vector<16x32xf32>, vector<16x32xf32>, vector<16x32xf32> -> vector<16x96xf32>
    %c0_10 = arith.constant 0 : index
    %c0_11 = arith.constant 0 : index
    %39 = vector.load %arg2[%c0_10, %c0_11] : memref<96x32xf32, #tpu.memory_space<vmem>>, vector<96x32xf32>
    %cst_12 = arith.constant dense<0.000000e+00> : vector<16x32xf32>
    %40 = tpu.matmul %38, %39, %cst_12 {dimension_numbers = #tpu.dot_dimension_numbers<[1], [0], [0], [1], [0, 0, 1, 1], [], []>} : vector<16x96xf32>, vector<96x32xf32>, vector<16x32xf32> -> vector<16x32xf32>
    %c0_13 = arith.constant 0 : index
    %c0_14 = arith.constant 0 : index
    %41 = vector.load %arg3[%c0_13, %c0_14] : memref<1x32xf32, #tpu.memory_space<vmem>>, vector<1x32xf32>
    %42 = vector.broadcast %41 : vector<1x32xf32> to vector<16x32xf32>
    %43 = arith.addf %40, %42 : vector<16x32xf32>
    %cst_15 = arith.constant 0.000000e+00 : f32
    %44 = vector.broadcast %cst_15 : f32 to vector<16x32xf32>
    %45 = arith.maximumf %43, %44 : vector<16x32xf32>
    %46 = vector.extract_strided_slice %45 {offsets = [0, 0], sizes = [8, 32], strides = [1, 1]} : vector<16x32xf32> to vector<8x32xf32>
    %cst_16 = arith.constant dense<0xFF800000> : vector<32xf32>
    %47 = vector.multi_reduction <maximumf>, %46, %cst_16 [0] : vector<8x32xf32> to vector<32xf32>
    %48 = vector.shape_cast %47 : vector<32xf32> to vector<1x32xf32>
    %49 = vector.extract_strided_slice %45 {offsets = [8, 0], sizes = [8, 32], strides = [1, 1]} : vector<16x32xf32> to vector<8x32xf32>
    %cst_17 = arith.constant dense<0xFF800000> : vector<32xf32>
    %50 = vector.multi_reduction <maximumf>, %49, %cst_17 [0] : vector<8x32xf32> to vector<32xf32>
    %51 = vector.shape_cast %50 : vector<32xf32> to vector<1x32xf32>
    %52 = tpu.concatenate %48, %51 in 0 : vector<1x32xf32>, vector<1x32xf32> -> vector<2x32xf32>
    %c0_18 = arith.constant 0 : index
    %c0_19 = arith.constant 0 : index
    %53 = vector.load %arg4[%c0_18, %c0_19] : memref<32x128xf32, #tpu.memory_space<vmem>>, vector<32x128xf32>
    %cst_20 = arith.constant dense<0.000000e+00> : vector<2x128xf32>
    %54 = tpu.matmul %52, %53, %cst_20 {dimension_numbers = #tpu.dot_dimension_numbers<[1], [0], [0], [1], [0, 0, 1, 1], [], []>} : vector<2x32xf32>, vector<32x128xf32>, vector<2x128xf32> -> vector<2x128xf32>
    %c0_21 = arith.constant 0 : index
    %c0_22 = arith.constant 0 : index
    %55 = vector.load %arg5[%c0_21, %c0_22] : memref<1x128xf32, #tpu.memory_space<vmem>>, vector<1x128xf32>
    %56 = vector.broadcast %55 : vector<1x128xf32> to vector<2x128xf32>
    %57 = arith.addf %54, %56 : vector<2x128xf32>
    %c0_23 = arith.constant 0 : index
    %c0_24 = arith.constant 0 : index
    %58 = vector.load %arg6[%c0_23, %c0_24] : memref<2x128xf32, #tpu.memory_space<vmem>>, vector<2x128xf32>
    tpu.vector_store %arg6[%c0_23, %c0_24], %57 {strides = array<i32>} : memref<2x128xf32, #tpu.memory_space<vmem>>, vector<2x128xf32>,
    return
  }
}

</mosaic_0001>

<llo_original>
// kernel: torch_model_forward.1
$region0: #{torch_model_forward.1}
  #allocation0 [shape = 'u32[]', space=smem, size = 0x4, offset = 0x4, fixed_abs, tag = 'smem constant byte address 0x4 - core index']
  #allocation1 [shape = 'u32[144,128]{1,0:T(1,128)}', space=vmem, size = 0x12000, scoped, tag = 'internal scratch']
  %s0 = inlined_call_operand.vmem [shape: s32[16,1], index: 0, kind: input, shape index: {}]
  %s1 = inlined_call_operand.vmem [shape: f32[32,32], index: 1, kind: input, shape index: {}]
  %s2 = inlined_call_operand.vmem [shape: f32[96,32], index: 2, kind: input, shape index: {}]
  %s3 = inlined_call_operand.vmem [shape: f32[1,32], index: 3, kind: input, shape index: {}]
  %s4 = inlined_call_operand.vmem [shape: f32[32,128], index: 4, kind: input, shape index: {}]
  %s5 = inlined_call_operand.vmem [shape: f32[1,128], index: 5, kind: input, shape index: {}]
  %s6 = inlined_call_operand.hbm [shape: f32[2,128], index: 6, kind: output, shape index: {}]
  %s7 = sld [smem:[#allocation0]]
  $region34: #{torch_model_forward.1} parent=0
    _
  %s9 = ssub.s32 1, %s7
  %s10 = scalar_select 0, %s9, %s7
  $region1: #{torch_model_forward.1} parent=0
    #allocation2 [shape = 'u8[1024]{0}', space=vmem, size = 0x400, scoped, tag = 'output window, operand 0, single buffered']
    #allocation3 [shape = 's32[1]{0}', space=sflag, size = 0x4, scoped, tag = 'scoped memory for torch_model_forward.1']
    %11 = vsyncpa [#allocation3], 0
    // Predicated region
    $region2: #{torch_model_forward.1} parent=1 // pred_check
      _
    $region3: #{torch_model_forward.1} parent=1 // pred_check_branch
      %13 = sbr.rel (0) target = $region5
    $region4: #{torch_model_forward.1} parent=1 // pred_region
      _
    $region5: #{torch_model_forward.1} parent=1 // pred_fallthru
      _
    // Predicated region
    $region6: #{torch_model_forward.1} parent=1 // pred_check
      _
    $region7: #{torch_model_forward.1} parent=1 // pred_check_branch
      %15 = sbr.rel (0) target = $region9
    $region8: #{torch_model_forward.1} parent=1 // pred_region
      _
    $region9: #{torch_model_forward.1} parent=1 // pred_fallthru
      _
    // Predicated region
    $region10: #{torch_model_forward.1} parent=1 // pred_check
      _
    $region11: #{torch_model_forward.1} parent=1 // pred_check_branch
      %17 = sbr.rel (0) target = $region13
    $region12: #{torch_model_forward.1} parent=1 // pred_region
      _
    $region13: #{torch_model_forward.1} parent=1 // pred_fallthru
      _
    // Predicated region
    $region14: #{torch_model_forward.1} parent=1 // pred_check
      _
    $region15: #{torch_model_forward.1} parent=1 // pred_check_branch
      %19 = sbr.rel (0) target = $region17
    $region16: #{torch_model_forward.1} parent=1 // pred_region
      _
    $region17: #{torch_model_forward.1} parent=1 // pred_fallthru
      _
    // Predicated region
    $region18: #{torch_model_forward.1} parent=1 // pred_check
      _
    $region19: #{torch_model_forward.1} parent=1 // pred_check_branch
      %21 = sbr.rel (0) target = $region21
    $region20: #{torch_model_forward.1} parent=1 // pred_region
      _
    $region21: #{torch_model_forward.1} parent=1 // pred_fallthru
      _
    // Predicated region
    $region22: #{torch_model_forward.1} parent=1 // pred_check
      _
    $region23: #{torch_model_forward.1} parent=1 // pred_check_branch
      %23 = sbr.rel (0) target = $region25
    $region24: #{torch_model_forward.1} parent=1 // pred_region
      _
    $region25: #{torch_model_forward.1} parent=1 // pred_fallthru
      _
    %v24 = vld [vmem:[%s0] sm:$0xff]
    %v25 = vld [vmem:[%s0 + $0x8] sm:$0xff]
    %v26 = vlaneseq
    %v27 = vand.u32 %v26, 127
    %28 = vset.pattern.permute.xlu0 0
    %29 = vperm.xlu0 %28, %v24
    %v30 = vpop.permute.xlu0 %29
    %31 = vset.pattern.permute.xlu0 0
    %32 = vperm.xlu0 %31, %v25
    %v33 = vpop.permute.xlu0 %32
    %vm34 = vcmp.eq.s32.totalorder %v30, %v27
    %vm35 = vcmp.eq.s32.totalorder %v33, %v27
    %v36 = vsel %vm34, 1, 0
    %v37 = vsel %vm35, 1, 0
    %v38 = vcvt.s32.f32 %v36
    %v39 = vcvt.s32.f32 %v37
    %v40 = vld [vmem:[%s1] sm:$0xff]
    %v41 = vld [vmem:[%s1 + $0x8] sm:$0xff]
    %v42 = vld [vmem:[%s1 + $0x10] sm:$0xff]
    %v43 = vld [vmem:[%s1 + $0x18] sm:$0xff]
    %vm44 = vcmask 261120
    %v46 = vsel %vm44, %v38, 0
    %v49 = vsel %vm44, %v39, 0
    %51 = vmatprep.subr.mxu0 0.0
    %52 = vmatpush1.msra.mxu0 %v40
    %53 = vmatprep.subr.mxu0 0.0
    %54 = vmatpush1.msra.mxu0 %v41
    %55 = vmatprep.subr.mxu0 0.0
    %56 = vmatpush1.msra.mxu0 %v42
    %57 = vmatprep.subr.mxu0 0.0
    %58 = vmatpush1.msra.mxu0 %v43
    %59 = vmatprep.subr.mxu0 0.0
    %60 = vmatpush1.msra.mxu0 0.0
    %61 = vmatprep.subr.mxu0 0.0
    %62 = vmatpush1.msra.mxu0 0.0
    %63 = vmatprep.subr.mxu0 0.0
    %64 = vmatpush1.msra.mxu0 0.0
    %65 = vmatprep.subr.mxu0 0.0
    %66 = vmatpush1.msra.mxu0 0.0
    %67 = vmatprep.subr.mxu0 0.0
    %68 = vmatpush1.msra.mxu0 0.0
    %69 = vmatprep.subr.mxu0 0.0
    %70 = vmatpush1.msra.mxu0 0.0
    %71 = vmatprep.subr.mxu0 0.0
    %72 = vmatpush1.msra.mxu0 0.0
    %73 = vmatprep.subr.mxu0 0.0
    %74 = vmatpush1.msra.mxu0 0.0
    %75 = vmatprep.subr.mxu0 0.0
    %76 = vmatpush1.msra.mxu0 0.0
    %77 = vmatprep.subr.mxu0 0.0
    %78 = vmatpush1.msra.mxu0 0.0
    %79 = vmatprep.subr.mxu0 0.0
    %80 = vmatpush1.msra.mxu0 0.0
    %81 = vmatprep.subr.mxu0 0.0
    %82 = vmatpush1.msra.mxu0 0.0
    %83 = vmatprep.subr.mxu0 0.0
    %84 = vmatpush1.msra.mxu0 0.0
    %85 = vmatprep.subr.mxu0 0.0
    %86 = vmatpush1.msra.mxu0 0.0
    %87 = vmatprep.subr.mxu0 0.0
    %88 = vmatpush1.msra.mxu0 0.0
    %89 = vmatprep.subr.mxu0 0.0
    %90 = vmatpush1.msra.mxu0 0.0
    %91 = vmatprep.subr.mxu0 0.0
    %92 = vmatpush1.msra.mxu0 0.0
    %93 = vmatprep.subr.mxu0 0.0
    %94 = vmatpush1.msra.mxu0 0.0
    %95 = vmatprep.subr.mxu0 0.0
    %96 = vmatpush1.msra.mxu0 0.0
    %97 = vmatprep.subr.mxu0 0.0
    %98 = vmatpush1.msra.mxu0 0.0
    %99 = vmatprep.subr.mxu0 0.0
    %100 = vmatpush1.msra.mxu0 0.0
    %101 = vmatprep.subr.mxu0 0.0
    %102 = vmatpush1.msra.mxu0 0.0
    %103 = vmatprep.subr.mxu0 0.0
    %104 = vmatpush1.msra.mxu0 0.0
    %105 = vmatprep.subr.mxu0 0.0
    %106 = vmatpush1.msra.mxu0 0.0
    %107 = vmatprep.subr.mxu0 0.0
    %108 = vmatpush1.msra.mxu0 0.0
    %109 = vmatprep.subr.mxu0 0.0
    %110 = vmatpush1.msra.mxu0 0.0
    %111 = vmatprep.subr.mxu0 0.0
    %112 = vmatpush1.msra.mxu0 0.0
    %113 = vmatprep.subr.mxu0 0.0
    %114 = vmatpush1.msra.mxu0 0.0
    %115 = vmatprep.mubr.f32.mxu0 0.0
    %116 = vmatmul.mubr.f32.gmra.mrb[0].mxu0 %v46
    %v117 = vpop.f32.mrb[0].mxu0
    %v118 = vadd.f32 0.0, %v117
    %v119 = vpop.f32.mrb[0].mxu0
    %120 = vmatprep.mubr.f32.mxu0 0.0
    %121 = vmatmul.mubr.f32.gmra.mrb[0].mxu0 %v49
    %v122 = vpop.f32.mrb[0].mxu0
    %v123 = vadd.f32 0.0, %v122
    %v124 = vpop.f32.mrb[0].mxu0
    %125 = vdwg.mxu0
    %vm128 = vcmask 1040384
    %v129 = vrot.slane %v118, 7
    %v130 = vrot.slane %v123, 7
    %v131 = vsel %vm128, %v129, %v130
    %v134 = vsel %vm128, 0.0, %v129
    %vm135 = vcmask 1046528
    %v136 = vrot.slane %v118, 1
    %v137 = vrot.slane %v123, 1
    %v138 = vsel %vm135, %v136, %v137
    %v141 = vsel %vm135, %v137, 0.0
    %v142 = vlaneseq
    %v143 = vshrl.u32 %v142, 7
    %v144 = vadd.s32 %v143, 8
    %vm145 = vcmp.lt.s32.totalorder %v143, 0
    %v146 = vsub.s32 0, %v143
    %v147 = vsel %vm145, %v146, %v143
    %v148 = vshrl.u32 %v147, 3
    %v149 = vand.u32 %v147, 7
    %v150 = vsub.s32 0, %v149
    %v151 = vsel %vm145, %v150, %v149
    %vm152 = vcmp.lt.s32.totalorder %v144, 0
    %v153 = vsub.s32 0, %v144
    %v154 = vsel %vm152, %v153, %v144
    %v155 = vshrl.u32 %v154, 3
    %v156 = vand.u32 %v154, 7
    %v157 = vsub.s32 0, %v156
    %v158 = vsel %vm152, %v157, %v156
    %vm159 = vcmp.ne.s32.totalorder %v151, 0
    %vm160 = vcmp.ne.s32.totalorder %v158, 0
    %vm161 = vcmp.lt.s32.totalorder %v151, 0
    %vm162 = vcmp.lt.s32.totalorder %v158, 0
    %vm163 = vmand %vm161, %vm159
    %vm164 = vmand %vm162, %vm160
    %v165 = vadd.s32 %v151, 8
    %v166 = vadd.s32 %v158, 8
    %v167 = vsel %vm163, %v165, %v151
    %v168 = vsel %vm164, %v166, %v158
    %vm169 = vcmp.gt.s32.totalorder %v167, 0
    %vm170 = vcmp.gt.s32.totalorder %v168, 0
    %v171 = vsel %vm169, %v134, 0.0
    %v172 = vsel %vm170, %v131, 0.0
    %vm173 = vcmp.lt.s32.totalorder %v167, 7
    %vm174 = vcmp.lt.s32.totalorder %v168, 7
    %v175 = vsel %vm173, %v138, 0.0
    %v176 = vsel %vm174, %v141, 0.0
    %177 = vrot.lane.b32.xlu0 %v118, 32
    %v178 = vpop.permute.xlu0 %177
    %179 = vrot.lane.b32.xlu0 %v123, 32
    %v180 = vpop.permute.xlu0 %179
    %185 = vrot.lane.b32.xlu0 %v175, 64
    %v186 = vpop.permute.xlu0 %185
    %187 = vrot.lane.b32.xlu0 %v176, 64
    %v188 = vpop.permute.xlu0 %187
    %v191 = vsel %vm44, %v171, %v178
    %v192 = vsel %vm44, %v172, %v180
    %vm193 = vcmask 523264
    %v194 = vsel %vm193, %v191, %v186
    %v195 = vsel %vm193, %v192, %v188
    %v196 = vld [vmem:[%s2] sm:$0xff]
    %v197 = vld [vmem:[%s2 + $0x8] sm:$0xff]
    %v198 = vld [vmem:[%s2 + $0x10] sm:$0xff]
    %v199 = vld [vmem:[%s2 + $0x18] sm:$0xff]
    %v200 = vld [vmem:[%s2 + $0x20] sm:$0xff]
    %v201 = vld [vmem:[%s2 + $0x28] sm:$0xff]
    %v202 = vld [vmem:[%s2 + $0x30] sm:$0xff]
    %v203 = vld [vmem:[%s2 + $0x38] sm:$0xff]
    %v204 = vld [vmem:[%s2 + $0x40] sm:$0xff]
    %v205 = vld [vmem:[%s2 + $0x48] sm:$0xff]
    %v206 = vld [vmem:[%s2 + $0x50] sm:$0xff]
    %v207 = vld [vmem:[%s2 + $0x58] sm:$0xff]
    %v208 = vld [vmem:[%s3] sm:$0x1]
    %v210 = vlaneseq
    %v211 = vshrl.u32 %v210, 7
    %v212 = vsub.s32 0, %v211
    %v213 = vrot.slane %v208, %v212
    %vm215 = vcmask 785408
    %v217 = vsel %vm215, %v194, 0
    %v220 = vsel %vm215, %v195, 0
    %222 = vmatprep.subr.mxu0 0.0
    %223 = vmatpush1.msra.mxu0 %v196
    %224 = vmatprep.subr.mxu0 0.0
    %225 = vmatpush1.msra.mxu0 %v197
    %226 = vmatprep.subr.mxu0 0.0
    %227 = vmatpush1.msra.mxu0 %v198
    %228 = vmatprep.subr.mxu0 0.0
    %229 = vmatpush1.msra.mxu0 %v199
    %230 = vmatprep.subr.mxu0 0.0
    %231 = vmatpush1.msra.mxu0 %v200
    %232 = vmatprep.subr.mxu0 0.0
    %233 = vmatpush1.msra.mxu0 %v201
    %234 = vmatprep.subr.mxu0 0.0
    %235 = vmatpush1.msra.mxu0 %v202
    %236 = vmatprep.subr.mxu0 0.0
    %237 = vmatpush1.msra.mxu0 %v203
    %238 = vmatprep.subr.mxu0 0.0
    %239 = vmatpush1.msra.mxu0 %v204
    %240 = vmatprep.subr.mxu0 0.0
    %241 = vmatpush1.msra.mxu0 %v205
    %242 = vmatprep.subr.mxu0 0.0
    %243 = vmatpush1.msra.mxu0 %v206
    %244 = vmatprep.subr.mxu0 0.0
    %245 = vmatpush1.msra.mxu0 %v207
    %246 = vmatprep.subr.mxu0 0.0
    %247 = vmatpush1.msra.mxu0 0.0
    %248 = vmatprep.subr.mxu0 0.0
    %249 = vmatpush1.msra.mxu0 0.0
    %250 = vmatprep.subr.mxu0 0.0
    %251 = vmatpush1.msra.mxu0 0.0
    %252 = vmatprep.subr.mxu0 0.0
    %253 = vmatpush1.msra.mxu0 0.0
    %254 = vmatprep.subr.mxu0 0.0
    %255 = vmatpush1.msra.mxu0 0.0
    %256 = vmatprep.subr.mxu0 0.0
    %257 = vmatpush1.msra.mxu0 0.0
    %258 = vmatprep.subr.mxu0 0.0
    %259 = vmatpush1.msra.mxu0 0.0
    %260 = vmatprep.subr.mxu0 0.0
    %261 = vmatpush1.msra.mxu0 0.0
    %262 = vmatprep.subr.mxu0 0.0
    %263 = vmatpush1.msra.mxu0 0.0
    %264 = vmatprep.subr.mxu0 0.0
    %265 = vmatpush1.msra.mxu0 0.0
    %266 = vmatprep.subr.mxu0 0.0
    %267 = vmatpush1.msra.mxu0 0.0
    %268 = vmatprep.subr.mxu0 0.0
    %269 = vmatpush1.msra.mxu0 0.0
    %270 = vmatprep.subr.mxu0 0.0
    %271 = vmatpush1.msra.mxu0 0.0
    %272 = vmatprep.subr.mxu0 0.0
    %273 = vmatpush1.msra.mxu0 0.0
    %274 = vmatprep.subr.mxu0 0.0
    %275 = vmatpush1.msra.mxu0 0.0
    %276 = vmatprep.subr.mxu0 0.0
    %277 = vmatpush1.msra.mxu0 0.0
    %278 = vmatprep.subr.mxu0 0.0
    %279 = vmatpush1.msra.mxu0 0.0
    %280 = vmatprep.subr.mxu0 0.0
    %281 = vmatpush1.msra.mxu0 0.0
    %282 = vmatprep.subr.mxu0 0.0
    %283 = vmatpush1.msra.mxu0 0.0
    %284 = vmatprep.subr.mxu0 0.0
    %285 = vmatpush1.msra.mxu0 0.0
    %286 = vmatprep.mubr.f32.mxu0 0.0
    %287 = vmatmul.mubr.f32.gmra.mrb[0].mxu0 %v217
    %v288 = vpop.f32.mrb[0].mxu0
    %v289 = vadd.f32 %v213, %v288
    %v290 = vpop.f32.mrb[0].mxu0
    %291 = vmatprep.mubr.f32.mxu0 0.0
    %292 = vmatmul.mubr.f32.gmra.mrb[0].mxu0 %v220
    %v293 = vpop.f32.mrb[0].mxu0
    %v294 = vadd.f32 %v213, %v293
    %v295 = vpop.f32.mrb[0].mxu0
    %296 = vdwg.mxu0
    %v297 = vmax.f32 %v289, 0.0
    %v298 = vmax.f32 %v294, 0.0
    %v299 = vsel %vm44, %v297, -inf
    %v300 = vrot.slane %v299, 4
    %v301 = vmax.f32 %v299, %v300
    %v302 = vrot.slane %v301, 2
    %v303 = vmax.f32 %v301, %v302
    %v304 = vrot.slane %v303, 1
    %v305 = vmax.f32 %v303, %v304
    %v306 = vsel %vm44, %v298, -inf
    %v307 = vrot.slane %v306, 4
    %v308 = vmax.f32 %v306, %v307
    %v309 = vrot.slane %v308, 2
    %v310 = vmax.f32 %v308, %v309
    %v311 = vrot.slane %v310, 1
    %v312 = vmax.f32 %v310, %v311
    %v313 = vsel %vm128, %v305, %v312
    %v314 = vld [vmem:[%s4] sm:$0xff]
    %v315 = vld [vmem:[%s4 + $0x8] sm:$0xff]
    %v316 = vld [vmem:[%s4 + $0x10] sm:$0xff]
    %v317 = vld [vmem:[%s4 + $0x18] sm:$0xff]
    %v318 = vld [vmem:[%s5] sm:$0x1]
    %v320 = vlaneseq
    %v321 = vshrl.u32 %v320, 7
    %v322 = vsub.s32 0, %v321
    %v323 = vrot.slane %v318, %v322
    %v326 = vsel %vm44, %v313, 0
    %328 = vmatprep.subr.mxu0 0.0
    %329 = vmatpush1.msra.mxu0 %v314
    %330 = vmatprep.subr.mxu0 0.0
    %331 = vmatpush1.msra.mxu0 %v315
    %332 = vmatprep.subr.mxu0 0.0
    %333 = vmatpush1.msra.mxu0 %v316
    %334 = vmatprep.subr.mxu0 0.0
    %335 = vmatpush1.msra.mxu0 %v317
    %336 = vmatprep.subr.mxu0 0.0
    %337 = vmatpush1.msra.mxu0 0.0
    %338 = vmatprep.subr.mxu0 0.0
    %339 = vmatpush1.msra.mxu0 0.0
    %340 = vmatprep.subr.mxu0 0.0
    %341 = vmatpush1.msra.mxu0 0.0
    %342 = vmatprep.subr.mxu0 0.0
    %343 = vmatpush1.msra.mxu0 0.0
    %344 = vmatprep.subr.mxu0 0.0
    %345 = vmatpush1.msra.mxu0 0.0
    %346 = vmatprep.subr.mxu0 0.0
    %347 = vmatpush1.msra.mxu0 0.0
    %348 = vmatprep.subr.mxu0 0.0
    %349 = vmatpush1.msra.mxu0 0.0
    %350 = vmatprep.subr.mxu0 0.0
    %351 = vmatpush1.msra.mxu0 0.0
    %352 = vmatprep.subr.mxu0 0.0
    %353 = vmatpush1.msra.mxu0 0.0
    %354 = vmatprep.subr.mxu0 0.0
    %355 = vmatpush1.msra.mxu0 0.0
    %356 = vmatprep.subr.mxu0 0.0
    %357 = vmatpush1.msra.mxu0 0.0
    %358 = vmatprep.subr.mxu0 0.0
    %359 = vmatpush1.msra.mxu0 0.0
    %360 = vmatprep.subr.mxu0 0.0
    %361 = vmatpush1.msra.mxu0 0.0
    %362 = vmatprep.subr.mxu0 0.0
    %363 = vmatpush1.msra.mxu0 0.0
    %364 = vmatprep.subr.mxu0 0.0
    %365 = vmatpush1.msra.mxu0 0.0
    %366 = vmatprep.subr.mxu0 0.0
    %367 = vmatpush1.msra.mxu0 0.0
    %368 = vmatprep.subr.mxu0 0.0
    %369 = vmatpush1.msra.mxu0 0.0
    %370 = vmatprep.subr.mxu0 0.0
    %371 = vmatpush1.msra.mxu0 0.0
    %372 = vmatprep.subr.mxu0 0.0
    %373 = vmatpush1.msra.mxu0 0.0
    %374 = vmatprep.subr.mxu0 0.0
    %375 = vmatpush1.msra.mxu0 0.0
    %376 = vmatprep.subr.mxu0 0.0
    %377 = vmatpush1.msra.mxu0 0.0
    %378 = vmatprep.subr.mxu0 0.0
    %379 = vmatpush1.msra.mxu0 0.0
    %380 = vmatprep.subr.mxu0 0.0
    %381 = vmatpush1.msra.mxu0 0.0
    %382 = vmatprep.subr.mxu0 0.0
    %383 = vmatpush1.msra.mxu0 0.0
    %384 = vmatprep.subr.mxu0 0.0
    %385 = vmatpush1.msra.mxu0 0.0
    %386 = vmatprep.subr.mxu0 0.0
    %387 = vmatpush1.msra.mxu0 0.0
    %388 = vmatprep.subr.mxu0 0.0
    %389 = vmatpush1.msra.mxu0 0.0
    %390 = vmatprep.subr.mxu0 0.0
    %391 = vmatpush1.msra.mxu0 0.0
    %392 = vmatprep.mubr.f32.mxu0 0.0
    %393 = vmatmul.mubr.f32.gmra.mrb[0].mxu0 %v326
    %v394 = vpop.f32.mrb[0].mxu0
    %v395 = vadd.f32 %v323, %v394
    %v396 = vpop.f32.mrb[0].mxu0
    %397 = vdwg.mxu0
    %398 = vst [vmem:[#allocation2] sm:$0x3] %v395
    // Predicated region
    $region26: #{torch_model_forward.1} parent=1 // pred_check
      _
    $region27: #{torch_model_forward.1} parent=1 // pred_check_branch
      %400 = sbr.rel (0) target = $region29
    $region28: #{torch_model_forward.1} parent=1 // pred_region
      %s402 = ssub.s32 32, 32
      %403 = vsyncadd [#allocation3], %s402
      %s405 = sshll.u32 [#allocation2], 4
      %s406 = int_to_ptr.vmem [resolvable:$true] %s405
      %408 = dma.vmem_to_hbm [thread:$0]  %s406, 32, %s6, [#allocation3]
    $region29: #{torch_model_forward.1} parent=1 // pred_fallthru
      _
    // Predicated region
    $region30: #{torch_model_forward.1} parent=1 // pred_check
      _
    $region31: #{torch_model_forward.1} parent=1 // pred_check_branch
      %410 = sbr.rel (0) target = $region33
    $region32: #{torch_model_forward.1} parent=1 // pred_region
      %411 = dma.done [#allocation3], 32
    $region33: #{torch_model_forward.1} parent=1 // pred_fallthru
      _
    %412 = vsyncpa [#allocation3], 1

</llo_original>
